<compile_context>
chip_gen: v7x
topology: tpu7x:2x2x1
jax: 0.10.0
libtpu: 0.0.40
codegen_flags: <defaults>
</compile_context>

<pallas_src>
import jax
import jax.numpy as jnp
from jax.experimental import pallas as pl
from jax.experimental.pallas import tpu as pltpu

FILTER_SIZES = (2, 3, 4)
NF = len(FILTER_SIZES)
MAX_FS = max(FILTER_SIZES)
LANE = 128


def _round_up(x, m):
    return -(-x // m) * m


def cnn_kernel(emb_ref, wpack_ref, bpack_ref, fcw_ref, fcb_ref, out_ref):
    tb, seq, emb_dim = emb_ref.shape
    _, _, packed_n = wpack_ref.shape
    _, f_pad = bpack_ref.shape
    o_pad = out_ref.shape[-1]

    # [TB, S, E] -> [TB*S, E] so every contraction is a plain 2-D MXU matmul.
    x = emb_ref[...].reshape(tb * seq, emb_dim)                    # bf16

    # One lane-packed matmul per kernel row k: [TB*S, E] @ [E, 3*F_pad].
    ys = []
    for k in range(MAX_FS):
        y = jnp.dot(x, wpack_ref[k], preferred_element_type=jnp.float32)
        ys.append(y.reshape(tb, seq, packed_n))                    # f32

    bias = bpack_ref[...]                                          # [NF, F_pad]
    out = jnp.zeros((tb, o_pad), jnp.float32)
    for j, fs in enumerate(FILTER_SIZES):
        length = seq - fs + 1                                      # valid conv len
        lo = j * f_pad
        # Shift-and-add the *narrow* per-k matmul results (conv == sum of
        # seq-shifted matmuls); lane-axis slices are 128-aligned.
        acc = ys[0][:, 0:length, lo:lo + f_pad]
        for k in range(1, fs):
            acc = acc + ys[k][:, k:k + length, lo:lo + f_pad]
        b_j = bias[j:j + 1, :][:, None, :]                         # [1,1,F_pad]
        conv = jnp.maximum(acc + b_j, 0.0)                         # ReLU, f32
        pooled = jnp.max(conv, axis=1)                             # max-over-time
        # Fused FC block (avoids a lane-axis concatenate of narrow pieces).
        out = out + jnp.dot(pooled.astype(jnp.bfloat16), fcw_ref[j],
                            preferred_element_type=jnp.float32)
    # TODO(synk): nn.Dropout is identity at inference; training-mode dropout
    # (pltpu PRNG masking of `pooled`) is not emitted here.
    out_ref[...] = out + fcb_ref[...]


def cnn_forward(text, embedding, kparams, output_dim, batch_tile=None):
    batch, seq = text.shape
    emb_dim = embedding.shape[1]
    assert seq >= MAX_FS, "seq_len must be >= the largest filter size"

    # TODO(synk): the embedding gather stays in plain JAX; fusing it into the
    # kernel (scalar-prefetched token ids + per-row DMA from the HBM table)
    # would save one full HBM round trip of the [B, S, E] activations.
    emb = jnp.take(embedding, text, axis=0).astype(jnp.bfloat16)   # [B, S, E]

    # Batch tile: small demo batches run as a single block; large batches tile
    # at 128 rows (re-derive downward for v7x's 64 MiB VMEM if S*E grows).
    tb = batch_tile if batch_tile is not None else (batch if batch <= 128 else 128)
    bp = _round_up(batch, tb)
    if bp != batch:
        emb = jnp.pad(emb, ((0, bp - batch), (0, 0), (0, 0)))

    f_pad = kparams["bpack"].shape[1]
    o_pad = kparams["fcb_pack"].shape[1]

    out = pl.pallas_call(
        cnn_kernel,
        out_shape=jax.ShapeDtypeStruct((bp, o_pad), jnp.float32),
        grid_spec=pltpu.PrefetchScalarGridSpec(
            num_scalar_prefetch=0,
            grid=(bp // tb,),
            in_specs=[
                pl.BlockSpec((tb, seq, emb_dim), lambda i: (i, 0, 0)),
                pl.BlockSpec((MAX_FS, emb_dim, NF * f_pad), lambda i: (0, 0, 0)),
                pl.BlockSpec((NF, f_pad), lambda i: (0, 0)),
                pl.BlockSpec((NF, f_pad, o_pad), lambda i: (0, 0, 0)),
                pl.BlockSpec((1, o_pad), lambda i: (0, 0)),
            ],
            out_specs=pl.BlockSpec((tb, o_pad), lambda i: (i, 0)),
        ),
        compiler_params=pltpu.CompilerParams(
            dimension_semantics=("parallel",)),
    )(emb, kparams["wpack"], kparams["bpack"],
      kparams["fcw_pack"], kparams["fcb_pack"])
    return out[:batch, :output_dim]


def init_params(key, vocab_size, embedding_dim, n_filters, filter_sizes,
                output_dim, pad_idx):
    ks = jax.random.split(key, 2 + 2 * len(filter_sizes))
    emb = jax.random.normal(ks[0], (vocab_size, embedding_dim),
                            jnp.float32) * 0.1
    emb = emb.at[pad_idx].set(0.0)                        # padding_idx row = 0
    params = {"embedding": emb}
    for i, fs in enumerate(filter_sizes):
        params[f"w{fs}"] = jax.random.normal(
            ks[1 + 2 * i], (fs, embedding_dim, n_filters), jnp.float32) * 0.1
        params[f"b{fs}"] = jax.random.normal(
            ks[2 + 2 * i], (1, n_filters), jnp.float32) * 0.01
    params["fc_w"] = jax.random.normal(
        ks[-1], (len(filter_sizes) * n_filters, output_dim), jnp.float32) * 0.1
    params["fc_b"] = jnp.zeros((1, output_dim), jnp.float32)
    return params


def pack_params(params, n_filters, embedding_dim, output_dim):
    """Pack the per-filter conv weights / FC into lane-dense padded slabs."""
    f_pad = _round_up(n_filters, LANE)
    o_pad = _round_up(output_dim, LANE)
    wpack = jnp.zeros((MAX_FS, embedding_dim, NF * f_pad), jnp.float32)
    bpack = jnp.zeros((NF, f_pad), jnp.float32)
    fcw = jnp.zeros((NF, f_pad, o_pad), jnp.float32)
    fcb = jnp.zeros((1, o_pad), jnp.float32)
    for j, fs in enumerate(FILTER_SIZES):
        wpack = wpack.at[:fs, :, j * f_pad:j * f_pad + n_filters].set(
            params[f"w{fs}"])
        bpack = bpack.at[j, :n_filters].set(params[f"b{fs}"].reshape(-1))
        fcw = fcw.at[j, :n_filters, :output_dim].set(
            params["fc_w"][j * n_filters:(j + 1) * n_filters, :])
    fcb = fcb.at[0, :output_dim].set(params["fc_b"].reshape(-1))
    return {"wpack": wpack.astype(jnp.bfloat16),
            "bpack": bpack,
            "fcw_pack": fcw.astype(jnp.bfloat16),
            "fcb_pack": fcb}


def reference_forward(text, params):
    """Pure-JAX reference mirroring the kernel's bf16 MXU inputs (f32 math)."""
    emb = jnp.take(params["embedding"], text, axis=0)
    emb = emb.astype(jnp.bfloat16).astype(jnp.float32)
    b, s, _ = emb.shape
    pooled = []
    for fs in FILTER_SIZES:
        w = params[f"w{fs}"].astype(jnp.bfloat16).astype(jnp.float32)
        length = s - fs + 1
        acc = jnp.zeros((b, length, w.shape[-1]), jnp.float32)
        for k in range(fs):
            acc = acc + jnp.einsum("ble,ef->blf", emb[:, k:k + length, :], w[k])
        conv = jnp.maximum(acc + params[f"b{fs}"].reshape(1, 1, -1), 0.0)
        pooled.append(jnp.max(conv, axis=1))
    cat = jnp.concatenate(pooled, axis=1)
    fcw = params["fc_w"].astype(jnp.bfloat16).astype(jnp.float32)
    return cat @ fcw + params["fc_b"].reshape(1, -1)


if __name__ == "__main__":
    vocab_size = 50
    embedding_dim = 32
    n_filters = 8
    output_dim = 4
    pad_idx = 0
    batch, seq_len = 2, 8

    key = jax.random.PRNGKey(0)
    pkey, tkey = jax.random.split(key)
    params = init_params(pkey, vocab_size, embedding_dim, n_filters,
                         FILTER_SIZES, output_dim, pad_idx)
    kparams = pack_params(params, n_filters, embedding_dim, output_dim)
    text = jax.random.randint(tkey, (batch, seq_len), 0, vocab_size,
                              dtype=jnp.int32)

    out = cnn_forward(text, params["embedding"], kparams, output_dim)
    jax.block_until_ready(out)
    assert out.shape == (batch, output_dim)

    ref = reference_forward(text, params)
    assert jnp.allclose(out, ref, rtol=2e-2, atol=2e-3), (
        "max abs err = %g" % float(jnp.max(jnp.abs(out - ref))))
    print("KERNEL_OK")
</pallas_src>

<mosaic_0001>
module attributes {stable_mosaic.version = 11 : i64} {
  func.func @cnn_kernel(%arg0: i32, %arg1: memref<2x8x32xbf16, #tpu.memory_space<vmem>>, %arg2: memref<4x32x384xbf16, #tpu.memory_space<vmem>>, %arg3: memref<3x128xf32, #tpu.memory_space<vmem>>, %arg4: memref<3x128x128xbf16, #tpu.memory_space<vmem>>, %arg5: memref<1x128xf32, #tpu.memory_space<vmem>>, %arg6: memref<2x128xf32, #tpu.memory_space<vmem>>) attributes {dimension_semantics = [#tpu.dimension_semantics<parallel>], iteration_bounds = array<i64: 1>, scalar_prefetch = 0 : i64, scratch_operands = 0 : i64, tpu.core_type = #tpu.core_type<tc>, window_params = [{transform_indices = @transform_0, window_bounds = array<i64: 2, 8, 32>}, {pipeline_mode = #tpu.pipeline_mode<synchronous>, transform_indices = @transform_1, window_bounds = array<i64: 4, 32, 384>}, {pipeline_mode = #tpu.pipeline_mode<synchronous>, transform_indices = @transform_2, window_bounds = array<i64: 3, 128>}, {pipeline_mode = #tpu.pipeline_mode<synchronous>, transform_indices = @transform_3, window_bounds = array<i64: 3, 128, 128>}, {pipeline_mode = #tpu.pipeline_mode<synchronous>, transform_indices = @transform_4, window_bounds = array<i64: 1, 128>}, {transform_indices = @transform_5, window_bounds = array<i64: 2, 128>}]} {
    %c0 = arith.constant 0 : index
    %c0_0 = arith.constant 0 : index
    %c0_1 = arith.constant 0 : index
    %0 = vector.load %arg1[%c0, %c0_0, %c0_1] : memref<2x8x32xbf16, #tpu.memory_space<vmem>>, vector<2x8x32xbf16>
    %1 = vector.shape_cast %0 : vector<2x8x32xbf16> to vector<16x32xbf16>
    %c0_2 = arith.constant 0 : index
    %c0_3 = arith.constant 0 : index
    %c0_4 = arith.constant 0 : index
    %2 = vector.load %arg2[%c0_2, %c0_3, %c0_4] : memref<4x32x384xbf16, #tpu.memory_space<vmem>>, vector<1x32x384xbf16>
    %3 = vector.shape_cast %2 : vector<1x32x384xbf16> to vector<32x384xbf16>
    %cst = arith.constant dense<0.000000e+00> : vector<16x384xf32>
    %4 = tpu.matmul %1, %3, %cst {dimension_numbers = #tpu.dot_dimension_numbers<[1], [0], [0], [1], [0, 0, 1, 1], [], []>} : vector<16x32xbf16>, vector<32x384xbf16>, vector<16x384xf32> -> vector<16x384xf32>
    %5 = vector.shape_cast %4 : vector<16x384xf32> to vector<2x8x384xf32>
    %c1 = arith.constant 1 : index
    %c0_5 = arith.constant 0 : index
    %c0_6 = arith.constant 0 : index
    %6 = vector.load %arg2[%c1, %c0_5, %c0_6] : memref<4x32x384xbf16, #tpu.memory_space<vmem>>, vector<1x32x384xbf16>
    %7 = vector.shape_cast %6 : vector<1x32x384xbf16> to vector<32x384xbf16>
    %cst_7 = arith.constant dense<0.000000e+00> : vector<16x384xf32>
    %8 = tpu.matmul %1, %7, %cst_7 {dimension_numbers = #tpu.dot_dimension_numbers<[1], [0], [0], [1], [0, 0, 1, 1], [], []>} : vector<16x32xbf16>, vector<32x384xbf16>, vector<16x384xf32> -> vector<16x384xf32>
    %9 = vector.shape_cast %8 : vector<16x384xf32> to vector<2x8x384xf32>
    %c2 = arith.constant 2 : index
    %c0_8 = arith.constant 0 : index
    %c0_9 = arith.constant 0 : index
    %10 = vector.load %arg2[%c2, %c0_8, %c0_9] : memref<4x32x384xbf16, #tpu.memory_space<vmem>>, vector<1x32x384xbf16>
    %11 = vector.shape_cast %10 : vector<1x32x384xbf16> to vector<32x384xbf16>
    %cst_10 = arith.constant dense<0.000000e+00> : vector<16x384xf32>
    %12 = tpu.matmul %1, %11, %cst_10 {dimension_numbers = #tpu.dot_dimension_numbers<[1], [0], [0], [1], [0, 0, 1, 1], [], []>} : vector<16x32xbf16>, vector<32x384xbf16>, vector<16x384xf32> -> vector<16x384xf32>
    %13 = vector.shape_cast %12 : vector<16x384xf32> to vector<2x8x384xf32>
    %c3 = arith.constant 3 : index
    %c0_11 = arith.constant 0 : index
    %c0_12 = arith.constant 0 : index
    %14 = vector.load %arg2[%c3, %c0_11, %c0_12] : memref<4x32x384xbf16, #tpu.memory_space<vmem>>, vector<1x32x384xbf16>
    %15 = vector.shape_cast %14 : vector<1x32x384xbf16> to vector<32x384xbf16>
    %cst_13 = arith.constant dense<0.000000e+00> : vector<16x384xf32>
    %16 = tpu.matmul %1, %15, %cst_13 {dimension_numbers = #tpu.dot_dimension_numbers<[1], [0], [0], [1], [0, 0, 1, 1], [], []>} : vector<16x32xbf16>, vector<32x384xbf16>, vector<16x384xf32> -> vector<16x384xf32>
    %17 = vector.shape_cast %16 : vector<16x384xf32> to vector<2x8x384xf32>
    %c0_14 = arith.constant 0 : index
    %c0_15 = arith.constant 0 : index
    %18 = vector.load %arg3[%c0_14, %c0_15] : memref<3x128xf32, #tpu.memory_space<vmem>>, vector<3x128xf32>
    %cst_16 = arith.constant 0.000000e+00 : f32
    %19 = vector.broadcast %cst_16 : f32 to vector<2x128xf32>
    %20 = vector.extract_strided_slice %5 {offsets = [0, 0, 0], sizes = [2, 7, 128], strides = [1, 1, 1]} : vector<2x8x384xf32> to vector<2x7x128xf32>
    %21 = vector.extract_strided_slice %9 {offsets = [0, 1, 0], sizes = [2, 7, 128], strides = [1, 1, 1]} : vector<2x8x384xf32> to vector<2x7x128xf32>
    %22 = arith.addf %20, %21 : vector<2x7x128xf32>
    %23 = vector.extract_strided_slice %18 {offsets = [0, 0], sizes = [1, 128], strides = [1, 1]} : vector<3x128xf32> to vector<1x128xf32>
    %24 = vector.shape_cast %23 : vector<1x128xf32> to vector<1x1x128xf32>
    %25 = vector.broadcast %24 : vector<1x1x128xf32> to vector<2x7x128xf32>
    %26 = arith.addf %22, %25 : vector<2x7x128xf32>
    %cst_17 = arith.constant 0.000000e+00 : f32
    %27 = vector.broadcast %cst_17 : f32 to vector<2x7x128xf32>
    %28 = arith.maximumf %26, %27 : vector<2x7x128xf32>
    %cst_18 = arith.constant dense<0xFF800000> : vector<2x128xf32>
    %29 = vector.multi_reduction <maximumf>, %28, %cst_18 [1] : vector<2x7x128xf32> to vector<2x128xf32>
    %30 = arith.truncf %29 : vector<2x128xf32> to vector<2x128xbf16>
    %c0_19 = arith.constant 0 : index
    %c0_20 = arith.constant 0 : index
    %c0_21 = arith.constant 0 : index
    %31 = vector.load %arg4[%c0_19, %c0_20, %c0_21] : memref<3x128x128xbf16, #tpu.memory_space<vmem>>, vector<1x128x128xbf16>
    %32 = vector.shape_cast %31 : vector<1x128x128xbf16> to vector<128x128xbf16>
    %cst_22 = arith.constant dense<0.000000e+00> : vector<2x128xf32>
    %33 = tpu.matmul %30, %32, %cst_22 {dimension_numbers = #tpu.dot_dimension_numbers<[1], [0], [0], [1], [0, 0, 1, 1], [], []>} : vector<2x128xbf16>, vector<128x128xbf16>, vector<2x128xf32> -> vector<2x128xf32>
    %34 = arith.addf %19, %33 : vector<2x128xf32>
    %35 = vector.extract_strided_slice %5 {offsets = [0, 0, 128], sizes = [2, 6, 128], strides = [1, 1, 1]} : vector<2x8x384xf32> to vector<2x6x128xf32>
    %36 = vector.extract_strided_slice %9 {offsets = [0, 1, 128], sizes = [2, 6, 128], strides = [1, 1, 1]} : vector<2x8x384xf32> to vector<2x6x128xf32>
    %37 = arith.addf %35, %36 : vector<2x6x128xf32>
    %38 = vector.extract_strided_slice %13 {offsets = [0, 2, 128], sizes = [2, 6, 128], strides = [1, 1, 1]} : vector<2x8x384xf32> to vector<2x6x128xf32>
    %39 = arith.addf %37, %38 : vector<2x6x128xf32>
    %40 = vector.extract_strided_slice %18 {offsets = [1, 0], sizes = [1, 128], strides = [1, 1]} : vector<3x128xf32> to vector<1x128xf32>
    %41 = vector.shape_cast %40 : vector<1x128xf32> to vector<1x1x128xf32>
    %42 = vector.broadcast %41 : vector<1x1x128xf32> to vector<2x6x128xf32>
    %43 = arith.addf %39, %42 : vector<2x6x128xf32>
    %cst_23 = arith.constant 0.000000e+00 : f32
    %44 = vector.broadcast %cst_23 : f32 to vector<2x6x128xf32>
    %45 = arith.maximumf %43, %44 : vector<2x6x128xf32>
    %cst_24 = arith.constant dense<0xFF800000> : vector<2x128xf32>
    %46 = vector.multi_reduction <maximumf>, %45, %cst_24 [1] : vector<2x6x128xf32> to vector<2x128xf32>
    %47 = arith.truncf %46 : vector<2x128xf32> to vector<2x128xbf16>
    %c1_25 = arith.constant 1 : index
    %c0_26 = arith.constant 0 : index
    %c0_27 = arith.constant 0 : index
    %48 = vector.load %arg4[%c1_25, %c0_26, %c0_27] : memref<3x128x128xbf16, #tpu.memory_space<vmem>>, vector<1x128x128xbf16>
    %49 = vector.shape_cast %48 : vector<1x128x128xbf16> to vector<128x128xbf16>
    %cst_28 = arith.constant dense<0.000000e+00> : vector<2x128xf32>
    %50 = tpu.matmul %47, %49, %cst_28 {dimension_numbers = #tpu.dot_dimension_numbers<[1], [0], [0], [1], [0, 0, 1, 1], [], []>} : vector<2x128xbf16>, vector<128x128xbf16>, vector<2x128xf32> -> vector<2x128xf32>
    %51 = arith.addf %34, %50 : vector<2x128xf32>
    %52 = vector.extract_strided_slice %5 {offsets = [0, 0, 256], sizes = [2, 5, 128], strides = [1, 1, 1]} : vector<2x8x384xf32> to vector<2x5x128xf32>
    %53 = vector.extract_strided_slice %9 {offsets = [0, 1, 256], sizes = [2, 5, 128], strides = [1, 1, 1]} : vector<2x8x384xf32> to vector<2x5x128xf32>
    %54 = arith.addf %52, %53 : vector<2x5x128xf32>
    %55 = vector.extract_strided_slice %13 {offsets = [0, 2, 256], sizes = [2, 5, 128], strides = [1, 1, 1]} : vector<2x8x384xf32> to vector<2x5x128xf32>
    %56 = arith.addf %54, %55 : vector<2x5x128xf32>
    %57 = vector.extract_strided_slice %17 {offsets = [0, 3, 256], sizes = [2, 5, 128], strides = [1, 1, 1]} : vector<2x8x384xf32> to vector<2x5x128xf32>
    %58 = arith.addf %56, %57 : vector<2x5x128xf32>
    %59 = vector.extract_strided_slice %18 {offsets = [2, 0], sizes = [1, 128], strides = [1, 1]} : vector<3x128xf32> to vector<1x128xf32>
    %60 = vector.shape_cast %59 : vector<1x128xf32> to vector<1x1x128xf32>
    %61 = vector.broadcast %60 : vector<1x1x128xf32> to vector<2x5x128xf32>
    %62 = arith.addf %58, %61 : vector<2x5x128xf32>
    %cst_29 = arith.constant 0.000000e+00 : f32
    %63 = vector.broadcast %cst_29 : f32 to vector<2x5x128xf32>
    %64 = arith.maximumf %62, %63 : vector<2x5x128xf32>
    %cst_30 = arith.constant dense<0xFF800000> : vector<2x128xf32>
    %65 = vector.multi_reduction <maximumf>, %64, %cst_30 [1] : vector<2x5x128xf32> to vector<2x128xf32>
    %66 = arith.truncf %65 : vector<2x128xf32> to vector<2x128xbf16>
    %c2_31 = arith.constant 2 : index
    %c0_32 = arith.constant 0 : index
    %c0_33 = arith.constant 0 : index
    %67 = vector.load %arg4[%c2_31, %c0_32, %c0_33] : memref<3x128x128xbf16, #tpu.memory_space<vmem>>, vector<1x128x128xbf16>
    %68 = vector.shape_cast %67 : vector<1x128x128xbf16> to vector<128x128xbf16>
    %cst_34 = arith.constant dense<0.000000e+00> : vector<2x128xf32>
    %69 = tpu.matmul %66, %68, %cst_34 {dimension_numbers = #tpu.dot_dimension_numbers<[1], [0], [0], [1], [0, 0, 1, 1], [], []>} : vector<2x128xbf16>, vector<128x128xbf16>, vector<2x128xf32> -> vector<2x128xf32>
    %70 = arith.addf %51, %69 : vector<2x128xf32>
    %c0_35 = arith.constant 0 : index
    %c0_36 = arith.constant 0 : index
    %71 = vector.load %arg5[%c0_35, %c0_36] : memref<1x128xf32, #tpu.memory_space<vmem>>, vector<1x128xf32>
    %72 = vector.broadcast %71 : vector<1x128xf32> to vector<2x128xf32>
    %73 = arith.addf %70, %72 : vector<2x128xf32>
    %c0_37 = arith.constant 0 : index
    %c0_38 = arith.constant 0 : index
    %74 = vector.load %arg6[%c0_37, %c0_38] : memref<2x128xf32, #tpu.memory_space<vmem>>, vector<2x128xf32>
    tpu.vector_store %arg6[%c0_37, %c0_38], %73 {strides = array<i32>} : memref<2x128xf32, #tpu.memory_space<vmem>>, vector<2x128xf32>,
    return
  }
  func.func @transform_0(%arg0: i32) -> (i32, i32, i32) {
    %c0_i32 = arith.constant 0 : i32
    %c0_i32_0 = arith.constant 0 : i32
    %c0_i32_1 = arith.constant 0 : i32
    return %arg0, %c0_i32, %c0_i32_0 : i32, i32, i32
  }
  func.func @transform_1(%arg0: i32) -> (i32, i32, i32) {
    %c0_i32 = arith.constant 0 : i32
    %c0_i32_0 = arith.constant 0 : i32
    %c0_i32_1 = arith.constant 0 : i32
    %c0_i32_2 = arith.constant 0 : i32
    return %c0_i32, %c0_i32_0, %c0_i32_1 : i32, i32, i32
  }
  func.func @transform_2(%arg0: i32) -> (i32, i32) {
    %c0_i32 = arith.constant 0 : i32
    %c0_i32_0 = arith.constant 0 : i32
    %c0_i32_1 = arith.constant 0 : i32
    return %c0_i32, %c0_i32_0 : i32, i32
  }
  func.func @transform_3(%arg0: i32) -> (i32, i32, i32) {
    %c0_i32 = arith.constant 0 : i32
    %c0_i32_0 = arith.constant 0 : i32
    %c0_i32_1 = arith.constant 0 : i32
    %c0_i32_2 = arith.constant 0 : i32
    return %c0_i32, %c0_i32_0, %c0_i32_1 : i32, i32, i32
  }
  func.func @transform_4(%arg0: i32) -> (i32, i32) {
    %c0_i32 = arith.constant 0 : i32
    %c0_i32_0 = arith.constant 0 : i32
    %c0_i32_1 = arith.constant 0 : i32
    return %c0_i32, %c0_i32_0 : i32, i32
  }
  func.func @transform_5(%arg0: i32) -> (i32, i32) {
    %c0_i32 = arith.constant 0 : i32
    %c0_i32_0 = arith.constant 0 : i32
    return %arg0, %c0_i32 : i32, i32
  }
}

</mosaic_0001>

<llo_original>
// kernel: tpu_custom_call.1
$region0: #{tpu_custom_call.1}
  #allocation0 [shape = 'u32[]', space=smem, size = 0x4, offset = 0x4, fixed_abs, tag = 'smem constant byte address 0x4 - core index']
  #allocation1 [shape = 'u32[144,128]{1,0:T(1,128)}', space=vmem, size = 0x12000, scoped, tag = 'internal scratch']
  %s0 = inlined_call_operand.hbm [shape: bf16[2,8,32], index: 0, kind: input, shape index: {}]
  %s1 = inlined_call_operand.hbm [shape: bf16[4,32,384], index: 1, kind: input, shape index: {}]
  %s2 = inlined_call_operand.vmem [shape: f32[3,128], index: 2, kind: input, shape index: {}]
  %s3 = inlined_call_operand.hbm [shape: bf16[3,128,128], index: 3, kind: input, shape index: {}]
  %s4 = inlined_call_operand.vmem [shape: f32[1,128], index: 4, kind: input, shape index: {}]
  %s5 = inlined_call_operand.hbm [shape: f32[2,128], index: 5, kind: output, shape index: {}]
  %s6 = sld [smem:[#allocation0]]
  $region42: #{tpu_custom_call.1} parent=0
    _
  %s8 = ssub.s32 1, %s6
  %s9 = scalar_select 0, %s8, %s6
  $region1: #{tpu_custom_call.1} parent=0
    #allocation2 [shape = 'u8[4096]{0}', space=vmem, size = 0x1000, scoped, tag = 'input window, operand 0, single buffered']
    #allocation3 [shape = 's32[1]{0}', space=sflag, size = 0x4, scoped, tag = 'scoped memory for tpu_custom_call.1']
    #allocation4 [shape = 's32[1]{0}', space=sflag, size = 0x4, scoped, tag = 'scoped memory for tpu_custom_call.1']
    #allocation5 [shape = 'u8[98304]{0}', space=vmem, size = 0x18000, scoped, tag = 'input window, operand 1, single buffered']
    #allocation6 [shape = 's32[1]{0}', space=sflag, size = 0x4, scoped, tag = 'scoped memory for tpu_custom_call.1']
    #allocation7 [shape = 'u8[98304]{0}', space=vmem, size = 0x18000, scoped, tag = 'input window, operand 3, single buffered']
    #allocation8 [shape = 'u8[1024]{0}', space=vmem, size = 0x400, scoped, tag = 'output window, operand 0, single buffered']
    %10 = vsyncpa [#allocation3], 0
    %11 = vsyncpa [#allocation6], 0
    %12 = vsyncpa [#allocation4], 0
    // Predicated region
    $region2: #{tpu_custom_call.1} parent=1 // pred_check
      _
    $region3: #{tpu_custom_call.1} parent=1 // pred_check_branch
      %14 = sbr.rel (0) target = $region5
    $region4: #{tpu_custom_call.1} parent=1 // pred_region
      %s16 = ssub.s32 128, 128
      %17 = vsyncadd [#allocation3], %s16
      %s18 = sshll.u32 [#allocation2], 4
      %s19 = int_to_ptr.vmem [resolvable:$true] %s18
      %24 = dma.hbm_to_vmem [thread:$0]  %s0, 128, %s19, [#allocation3], 64, 64, 4
    $region5: #{tpu_custom_call.1} parent=1 // pred_fallthru
      _
    // Predicated region
    $region6: #{tpu_custom_call.1} parent=1 // pred_check
      _
    $region7: #{tpu_custom_call.1} parent=1 // pred_check_branch
      %26 = sbr.rel (0) target = $region9
    $region8: #{tpu_custom_call.1} parent=1 // pred_region
      %s28 = ssub.s32 3072, 3072
      %29 = vsyncadd [#allocation6], %s28
      %s30 = sshll.u32 [#allocation5], 4
      %s31 = int_to_ptr.vmem [resolvable:$true] %s30
      %36 = dma.hbm_to_vmem [thread:$0]  %s1, 3072, %s31, [#allocation6], 192, 192, 12
    $region9: #{tpu_custom_call.1} parent=1 // pred_fallthru
      _
    // Predicated region
    $region10: #{tpu_custom_call.1} parent=1 // pred_check
      _
    $region11: #{tpu_custom_call.1} parent=1 // pred_check_branch
      %38 = sbr.rel (0) target = $region13
    $region12: #{tpu_custom_call.1} parent=1 // pred_region
      _
    $region13: #{tpu_custom_call.1} parent=1 // pred_fallthru
      _
    // Predicated region
    $region14: #{tpu_custom_call.1} parent=1 // pred_check
      _
    $region15: #{tpu_custom_call.1} parent=1 // pred_check_branch
      %40 = sbr.rel (0) target = $region17
    $region16: #{tpu_custom_call.1} parent=1 // pred_region
      %s42 = ssub.s32 3072, 3072
      %43 = vsyncadd [#allocation6], %s42
      %s44 = sshll.u32 [#allocation7], 4
      %s45 = int_to_ptr.vmem [resolvable:$true] %s44
      %50 = dma.hbm_to_vmem [thread:$0]  %s3, 3072, %s45, [#allocation6], 64, 64, 4
    $region17: #{tpu_custom_call.1} parent=1 // pred_fallthru
      _
    // Predicated region
    $region18: #{tpu_custom_call.1} parent=1 // pred_check
      _
    $region19: #{tpu_custom_call.1} parent=1 // pred_check_branch
      %52 = sbr.rel (0) target = $region21
    $region20: #{tpu_custom_call.1} parent=1 // pred_region
      _
    $region21: #{tpu_custom_call.1} parent=1 // pred_fallthru
      _
    // Predicated region
    $region22: #{tpu_custom_call.1} parent=1 // pred_check
      _
    $region23: #{tpu_custom_call.1} parent=1 // pred_check_branch
      %54 = sbr.rel (0) target = $region25
    $region24: #{tpu_custom_call.1} parent=1 // pred_region
      %55 = dma.done [#allocation3], 128
    $region25: #{tpu_custom_call.1} parent=1 // pred_fallthru
      _
    // Predicated region
    $region26: #{tpu_custom_call.1} parent=1 // pred_check
      _
    $region27: #{tpu_custom_call.1} parent=1 // pred_check_branch
      %57 = sbr.rel (0) target = $region29
    $region28: #{tpu_custom_call.1} parent=1 // pred_region
      %58 = dma.done [#allocation6], 3072
    $region29: #{tpu_custom_call.1} parent=1 // pred_fallthru
      _
    // Predicated region
    $region30: #{tpu_custom_call.1} parent=1 // pred_check
      _
    $region31: #{tpu_custom_call.1} parent=1 // pred_check_branch
      %60 = sbr.rel (0) target = $region33
    $region32: #{tpu_custom_call.1} parent=1 // pred_region
      %61 = dma.done [#allocation6], 3072
    $region33: #{tpu_custom_call.1} parent=1 // pred_fallthru
      _
    %v63 = vld [vmem:[#allocation2] sm:$0xf]
    %v64 = vld [vmem:[#allocation2 + $0x4] sm:$0xf]
    %v65 = vld [vmem:[#allocation5] sm:$0xff]
    %v66 = vld [vmem:[#allocation5 + $0x8] sm:$0xf]
    %v67 = vld [vmem:[#allocation5 + $0xc] sm:$0xff]
    %v68 = vld [vmem:[#allocation5 + $0x14] sm:$0xf]
    %v69 = vld [vmem:[#allocation5 + $0x18] sm:$0xff]
    %v70 = vld [vmem:[#allocation5 + $0x20] sm:$0xf]
    %v71 = vld [vmem:[#allocation5 + $0x24] sm:$0xff]
    %v72 = vld [vmem:[#allocation5 + $0x2c] sm:$0xf]
    %v75 = vunpack.c.l.b16 %v63
    %v76 = vunpack.c.l.b16 %v64
    %v77 = vpack.c.b16 %v76, %v75
    %v86 = vunpack.c.l.b16 %v65
    %v87 = vunpack.c.h.b16 %v65
    %v88 = vunpack.c.l.b16 %v66
    %v89 = vunpack.c.l.b16 %v67
    %v90 = vunpack.c.h.b16 %v67
    %v91 = vunpack.c.l.b16 %v68
    %v92 = vunpack.c.l.b16 %v69
    %v93 = vunpack.c.h.b16 %v69
    %v94 = vunpack.c.l.b16 %v70
    %v95 = vunpack.c.l.b16 %v71
    %v96 = vunpack.c.h.b16 %v71
    %v97 = vunpack.c.l.b16 %v72
    %v98 = vpack.c.b16 %v89, %v86
    %v99 = vpack.c.b16 %v90, %v87
    %v100 = vpack.c.b16 %v91, %v88
    %v101 = vpack.c.b16 %v95, %v92
    %v102 = vpack.c.b16 %v96, %v93
    %v103 = vpack.c.b16 %v97, %v94
    %vm110 = vcmask 261120
    %v112 = vsel %vm110, %v77, 0
    %114 = vmatprep.subr.bf16.mxu0 %v99
    %115 = vmatpush1.bf16.msra.mxu0 %v98
    %116 = vmatprep.subr.bf16.mxu0 %v102
    %117 = vmatpush1.bf16.msra.mxu0 %v101
    %118 = vmatprep.subr.bf16.mxu0 0
    %119 = vmatpush1.bf16.msra.mxu0 0
    %120 = vmatprep.subr.bf16.mxu0 0
    %121 = vmatpush1.bf16.msra.mxu0 0
    %122 = vmatprep.subr.bf16.mxu0 0
    %123 = vmatpush1.bf16.msra.mxu0 0
    %124 = vmatprep.subr.bf16.mxu0 0
    %125 = vmatpush1.bf16.msra.mxu0 0
    %126 = vmatprep.subr.bf16.mxu0 0
    %127 = vmatpush1.bf16.msra.mxu0 0
    %128 = vmatprep.subr.bf16.mxu0 0
    %129 = vmatpush1.bf16.msra.mxu0 0
    %130 = vmatprep.subr.bf16.mxu0 0
    %131 = vmatpush1.bf16.msra.mxu0 0
    %132 = vmatprep.subr.bf16.mxu0 0
    %133 = vmatpush1.bf16.msra.mxu0 0
    %134 = vmatprep.subr.bf16.mxu0 0
    %135 = vmatpush1.bf16.msra.mxu0 0
    %136 = vmatprep.subr.bf16.mxu0 0
    %137 = vmatpush1.bf16.msra.mxu0 0
    %138 = vmatprep.subr.bf16.mxu0 0
    %139 = vmatpush1.bf16.msra.mxu0 0
    %140 = vmatprep.subr.bf16.mxu0 0
    %141 = vmatpush1.bf16.msra.mxu0 0
    %142 = vmatprep.subr.bf16.mxu0 0
    %143 = vmatpush1.bf16.msra.mxu0 0
    %144 = vmatprep.subr.bf16.mxu0 0
    %145 = vmatpush1.bf16.msra.mxu0 0
    %146 = vmatprep.mubr.bf16.mxu0 0
    %147 = vmatmul.mubr.bf16.gmra.mrb[0].mxu0 %v112
    %v148 = vpop.f32.mrb[0].mxu0
    %v149 = vadd.f32 0.0, %v148
    %v150 = vpop.f32.mrb[0].mxu0
    %v151 = vadd.f32 0.0, %v150
    %v152 = vpop.f32.mrb[0].mxu0
    %v153 = vadd.f32 0.0, %v152
    %v154 = vpop.f32.mrb[0].mxu0
    %v155 = vadd.f32 0.0, %v154
    %156 = vdwg.mxu0
    %157 = vmatprep.subr.bf16.mxu0 0
    %158 = vmatpush1.bf16.msra.mxu0 %v100
    %159 = vmatprep.subr.bf16.mxu0 0
    %160 = vmatpush1.bf16.msra.mxu0 %v103
    %161 = vmatprep.subr.bf16.mxu0 0
    %162 = vmatpush1.bf16.msra.mxu0 0
    %163 = vmatprep.subr.bf16.mxu0 0
    %164 = vmatpush1.bf16.msra.mxu0 0
    %165 = vmatprep.subr.bf16.mxu0 0
    %166 = vmatpush1.bf16.msra.mxu0 0
    %167 = vmatprep.subr.bf16.mxu0 0
    %168 = vmatpush1.bf16.msra.mxu0 0
    %169 = vmatprep.subr.bf16.mxu0 0
    %170 = vmatpush1.bf16.msra.mxu0 0
    %171 = vmatprep.subr.bf16.mxu0 0
    %172 = vmatpush1.bf16.msra.mxu0 0
    %173 = vmatprep.subr.bf16.mxu0 0
    %174 = vmatpush1.bf16.msra.mxu0 0
    %175 = vmatprep.subr.bf16.mxu0 0
    %176 = vmatpush1.bf16.msra.mxu0 0
    %177 = vmatprep.subr.bf16.mxu0 0
    %178 = vmatpush1.bf16.msra.mxu0 0
    %179 = vmatprep.subr.bf16.mxu0 0
    %180 = vmatpush1.bf16.msra.mxu0 0
    %181 = vmatprep.subr.bf16.mxu0 0
    %182 = vmatpush1.bf16.msra.mxu0 0
    %183 = vmatprep.subr.bf16.mxu0 0
    %184 = vmatpush1.bf16.msra.mxu0 0
    %185 = vmatprep.subr.bf16.mxu0 0
    %186 = vmatpush1.bf16.msra.mxu0 0
    %187 = vmatprep.subr.bf16.mxu0 0
    %188 = vmatpush1.bf16.msra.mxu0 0
    %189 = vmatprep.mubr.bf16.mxu0 0
    %190 = vmatmul.mubr.bf16.gmra.mrb[0].mxu0 %v112
    %v191 = vpop.f32.mrb[0].mxu0
    %v192 = vadd.f32 0.0, %v191
    %v193 = vpop.f32.mrb[0].mxu0
    %v194 = vpop.f32.mrb[0].mxu0
    %v195 = vadd.f32 0.0, %v194
    %v196 = vpop.f32.mrb[0].mxu0
    %197 = vdwg.mxu0
    %s198 = scalar_lea.vmem [#allocation5], 48
    %v199 = vld [vmem:[%s198] sm:$0xff]
    %v200 = vld [vmem:[%s198 + $0x8] sm:$0xf]
    %v201 = vld [vmem:[%s198 + $0xc] sm:$0xff]
    %v202 = vld [vmem:[%s198 + $0x14] sm:$0xf]
    %v203 = vld [vmem:[%s198 + $0x18] sm:$0xff]
    %v204 = vld [vmem:[%s198 + $0x20] sm:$0xf]
    %v205 = vld [vmem:[%s198 + $0x24] sm:$0xff]
    %v206 = vld [vmem:[%s198 + $0x2c] sm:$0xf]
    %v215 = vunpack.c.l.b16 %v199
    %v216 = vunpack.c.h.b16 %v199
    %v217 = vunpack.c.l.b16 %v200
    %v218 = vunpack.c.l.b16 %v201
    %v219 = vunpack.c.h.b16 %v201
    %v220 = vunpack.c.l.b16 %v202
    %v221 = vunpack.c.l.b16 %v203
    %v222 = vunpack.c.h.b16 %v203
    %v223 = vunpack.c.l.b16 %v204
    %v224 = vunpack.c.l.b16 %v205
    %v225 = vunpack.c.h.b16 %v205
    %v226 = vunpack.c.l.b16 %v206
    %v227 = vpack.c.b16 %v218, %v215
    %v228 = vpack.c.b16 %v219, %v216
    %v229 = vpack.c.b16 %v220, %v217
    %v230 = vpack.c.b16 %v224, %v221
    %v231 = vpack.c.b16 %v225, %v222
    %v232 = vpack.c.b16 %v226, %v223
    %239 = vmatprep.subr.bf16.mxu0 %v228
    %240 = vmatpush1.bf16.msra.mxu0 %v227
    %241 = vmatprep.subr.bf16.mxu0 %v231
    %242 = vmatpush1.bf16.msra.mxu0 %v230
    %243 = vmatprep.subr.bf16.mxu0 0
    %244 = vmatpush1.bf16.msra.mxu0 0
    %245 = vmatprep.subr.bf16.mxu0 0
    %246 = vmatpush1.bf16.msra.mxu0 0
    %247 = vmatprep.subr.bf16.mxu0 0
    %248 = vmatpush1.bf16.msra.mxu0 0
    %249 = vmatprep.subr.bf16.mxu0 0
    %250 = vmatpush1.bf16.msra.mxu0 0
    %251 = vmatprep.subr.bf16.mxu0 0
    %252 = vmatpush1.bf16.msra.mxu0 0
    %253 = vmatprep.subr.bf16.mxu0 0
    %254 = vmatpush1.bf16.msra.mxu0 0
    %255 = vmatprep.subr.bf16.mxu0 0
    %256 = vmatpush1.bf16.msra.mxu0 0
    %257 = vmatprep.subr.bf16.mxu0 0
    %258 = vmatpush1.bf16.msra.mxu0 0
    %259 = vmatprep.subr.bf16.mxu0 0
    %260 = vmatpush1.bf16.msra.mxu0 0
    %261 = vmatprep.subr.bf16.mxu0 0
    %262 = vmatpush1.bf16.msra.mxu0 0
    %263 = vmatprep.subr.bf16.mxu0 0
    %264 = vmatpush1.bf16.msra.mxu0 0
    %265 = vmatprep.subr.bf16.mxu0 0
    %266 = vmatpush1.bf16.msra.mxu0 0
    %267 = vmatprep.subr.bf16.mxu0 0
    %268 = vmatpush1.bf16.msra.mxu0 0
    %269 = vmatprep.subr.bf16.mxu0 0
    %270 = vmatpush1.bf16.msra.mxu0 0
    %271 = vmatprep.mubr.bf16.mxu0 0
    %272 = vmatmul.mubr.bf16.gmra.mrb[0].mxu0 %v112
    %v273 = vpop.f32.mrb[0].mxu0
    %v274 = vadd.f32 0.0, %v273
    %v275 = vpop.f32.mrb[0].mxu0
    %v276 = vadd.f32 0.0, %v275
    %v277 = vpop.f32.mrb[0].mxu0
    %v278 = vadd.f32 0.0, %v277
    %v279 = vpop.f32.mrb[0].mxu0
    %v280 = vadd.f32 0.0, %v279
    %281 = vdwg.mxu0
    %282 = vmatprep.subr.bf16.mxu0 0
    %283 = vmatpush1.bf16.msra.mxu0 %v229
    %284 = vmatprep.subr.bf16.mxu0 0
    %285 = vmatpush1.bf16.msra.mxu0 %v232
    %286 = vmatprep.subr.bf16.mxu0 0
    %287 = vmatpush1.bf16.msra.mxu0 0
    %288 = vmatprep.subr.bf16.mxu0 0
    %289 = vmatpush1.bf16.msra.mxu0 0
    %290 = vmatprep.subr.bf16.mxu0 0
    %291 = vmatpush1.bf16.msra.mxu0 0
    %292 = vmatprep.subr.bf16.mxu0 0
    %293 = vmatpush1.bf16.msra.mxu0 0
    %294 = vmatprep.subr.bf16.mxu0 0
    %295 = vmatpush1.bf16.msra.mxu0 0
    %296 = vmatprep.subr.bf16.mxu0 0
    %297 = vmatpush1.bf16.msra.mxu0 0
    %298 = vmatprep.subr.bf16.mxu0 0
    %299 = vmatpush1.bf16.msra.mxu0 0
    %300 = vmatprep.subr.bf16.mxu0 0
    %301 = vmatpush1.bf16.msra.mxu0 0
    %302 = vmatprep.subr.bf16.mxu0 0
    %303 = vmatpush1.bf16.msra.mxu0 0
    %304 = vmatprep.subr.bf16.mxu0 0
    %305 = vmatpush1.bf16.msra.mxu0 0
    %306 = vmatprep.subr.bf16.mxu0 0
    %307 = vmatpush1.bf16.msra.mxu0 0
    %308 = vmatprep.subr.bf16.mxu0 0
    %309 = vmatpush1.bf16.msra.mxu0 0
    %310 = vmatprep.subr.bf16.mxu0 0
    %311 = vmatpush1.bf16.msra.mxu0 0
    %312 = vmatprep.subr.bf16.mxu0 0
    %313 = vmatpush1.bf16.msra.mxu0 0
    %314 = vmatprep.mubr.bf16.mxu0 0
    %315 = vmatmul.mubr.bf16.gmra.mrb[0].mxu0 %v112
    %v316 = vpop.f32.mrb[0].mxu0
    %v317 = vadd.f32 0.0, %v316
    %v318 = vpop.f32.mrb[0].mxu0
    %v319 = vpop.f32.mrb[0].mxu0
    %v320 = vadd.f32 0.0, %v319
    %v321 = vpop.f32.mrb[0].mxu0
    %322 = vdwg.mxu0
    %s323 = scalar_lea.vmem [#allocation5], 96
    %v324 = vld [vmem:[%s323] sm:$0xff]
    %v325 = vld [vmem:[%s323 + $0x8] sm:$0xf]
    %v326 = vld [vmem:[%s323 + $0xc] sm:$0xff]
    %v327 = vld [vmem:[%s323 + $0x14] sm:$0xf]
    %v328 = vld [vmem:[%s323 + $0x18] sm:$0xff]
    %v329 = vld [vmem:[%s323 + $0x20] sm:$0xf]
    %v330 = vld [vmem:[%s323 + $0x24] sm:$0xff]
    %v331 = vld [vmem:[%s323 + $0x2c] sm:$0xf]
    %v340 = vunpack.c.l.b16 %v324
    %v341 = vunpack.c.h.b16 %v324
    %v342 = vunpack.c.l.b16 %v325
    %v343 = vunpack.c.l.b16 %v326
    %v344 = vunpack.c.h.b16 %v326
    %v345 = vunpack.c.l.b16 %v327
    %v346 = vunpack.c.l.b16 %v328
    %v347 = vunpack.c.h.b16 %v328
    %v348 = vunpack.c.l.b16 %v329
    %v349 = vunpack.c.l.b16 %v330
    %v350 = vunpack.c.h.b16 %v330
    %v351 = vunpack.c.l.b16 %v331
    %v352 = vpack.c.b16 %v343, %v340
    %v353 = vpack.c.b16 %v344, %v341
    %v354 = vpack.c.b16 %v345, %v342
    %v355 = vpack.c.b16 %v349, %v346
    %v356 = vpack.c.b16 %v350, %v347
    %v357 = vpack.c.b16 %v351, %v348
    %364 = vmatprep.subr.bf16.mxu0 %v353
    %365 = vmatpush1.bf16.msra.mxu0 %v352
    %366 = vmatprep.subr.bf16.mxu0 %v356
    %367 = vmatpush1.bf16.msra.mxu0 %v355
    %368 = vmatprep.subr.bf16.mxu0 0
    %369 = vmatpush1.bf16.msra.mxu0 0
    %370 = vmatprep.subr.bf16.mxu0 0
    %371 = vmatpush1.bf16.msra.mxu0 0
    %372 = vmatprep.subr.bf16.mxu0 0
    %373 = vmatpush1.bf16.msra.mxu0 0
    %374 = vmatprep.subr.bf16.mxu0 0
    %375 = vmatpush1.bf16.msra.mxu0 0
    %376 = vmatprep.subr.bf16.mxu0 0
    %377 = vmatpush1.bf16.msra.mxu0 0
    %378 = vmatprep.subr.bf16.mxu0 0
    %379 = vmatpush1.bf16.msra.mxu0 0
    %380 = vmatprep.subr.bf16.mxu0 0
    %381 = vmatpush1.bf16.msra.mxu0 0
    %382 = vmatprep.subr.bf16.mxu0 0
    %383 = vmatpush1.bf16.msra.mxu0 0
    %384 = vmatprep.subr.bf16.mxu0 0
    %385 = vmatpush1.bf16.msra.mxu0 0
    %386 = vmatprep.subr.bf16.mxu0 0
    %387 = vmatpush1.bf16.msra.mxu0 0
    %388 = vmatprep.subr.bf16.mxu0 0
    %389 = vmatpush1.bf16.msra.mxu0 0
    %390 = vmatprep.subr.bf16.mxu0 0
    %391 = vmatpush1.bf16.msra.mxu0 0
    %392 = vmatprep.subr.bf16.mxu0 0
    %393 = vmatpush1.bf16.msra.mxu0 0
    %394 = vmatprep.subr.bf16.mxu0 0
    %395 = vmatpush1.bf16.msra.mxu0 0
    %396 = vmatprep.mubr.bf16.mxu0 0
    %397 = vmatmul.mubr.bf16.gmra.mrb[0].mxu0 %v112
    %v398 = vpop.f32.mrb[0].mxu0
    %v399 = vpop.f32.mrb[0].mxu0
    %v400 = vadd.f32 0.0, %v399
    %v401 = vpop.f32.mrb[0].mxu0
    %v402 = vpop.f32.mrb[0].mxu0
    %v403 = vadd.f32 0.0, %v402
    %404 = vdwg.mxu0
    %405 = vmatprep.subr.bf16.mxu0 0
    %406 = vmatpush1.bf16.msra.mxu0 %v354
    %407 = vmatprep.subr.bf16.mxu0 0
    %408 = vmatpush1.bf16.msra.mxu0 %v357
    %409 = vmatprep.subr.bf16.mxu0 0
    %410 = vmatpush1.bf16.msra.mxu0 0
    %411 = vmatprep.subr.bf16.mxu0 0
    %412 = vmatpush1.bf16.msra.mxu0 0
    %413 = vmatprep.subr.bf16.mxu0 0
    %414 = vmatpush1.bf16.msra.mxu0 0
    %415 = vmatprep.subr.bf16.mxu0 0
    %416 = vmatpush1.bf16.msra.mxu0 0
    %417 = vmatprep.subr.bf16.mxu0 0
    %418 = vmatpush1.bf16.msra.mxu0 0
    %419 = vmatprep.subr.bf16.mxu0 0
    %420 = vmatpush1.bf16.msra.mxu0 0
    %421 = vmatprep.subr.bf16.mxu0 0
    %422 = vmatpush1.bf16.msra.mxu0 0
    %423 = vmatprep.subr.bf16.mxu0 0
    %424 = vmatpush1.bf16.msra.mxu0 0
    %425 = vmatprep.subr.bf16.mxu0 0
    %426 = vmatpush1.bf16.msra.mxu0 0
    %427 = vmatprep.subr.bf16.mxu0 0
    %428 = vmatpush1.bf16.msra.mxu0 0
    %429 = vmatprep.subr.bf16.mxu0 0
    %430 = vmatpush1.bf16.msra.mxu0 0
    %431 = vmatprep.subr.bf16.mxu0 0
    %432 = vmatpush1.bf16.msra.mxu0 0
    %433 = vmatprep.subr.bf16.mxu0 0
    %434 = vmatpush1.bf16.msra.mxu0 0
    %435 = vmatprep.subr.bf16.mxu0 0
    %436 = vmatpush1.bf16.msra.mxu0 0
    %437 = vmatprep.mubr.bf16.mxu0 0
    %438 = vmatmul.mubr.bf16.gmra.mrb[0].mxu0 %v112
    %v439 = vpop.f32.mrb[0].mxu0
    %v440 = vadd.f32 0.0, %v439
    %v441 = vpop.f32.mrb[0].mxu0
    %v442 = vpop.f32.mrb[0].mxu0
    %v443 = vadd.f32 0.0, %v442
    %v444 = vpop.f32.mrb[0].mxu0
    %445 = vdwg.mxu0
    %s446 = scalar_lea.vmem [#allocation5], 144
    %v447 = vld [vmem:[%s446 + $0x8] sm:$0xf]
    %v448 = vld [vmem:[%s446 + $0x14] sm:$0xf]
    %v449 = vld [vmem:[%s446 + $0x20] sm:$0xf]
    %v450 = vld [vmem:[%s446 + $0x2c] sm:$0xf]
    %v455 = vunpack.c.l.b16 %v447
    %v456 = vunpack.c.l.b16 %v448
    %v457 = vunpack.c.l.b16 %v449
    %v458 = vunpack.c.l.b16 %v450
    %v459 = vpack.c.b16 %v456, %v455
    %v460 = vpack.c.b16 %v458, %v457
    %463 = vmatprep.subr.bf16.mxu0 0
    %464 = vmatpush1.bf16.msra.mxu0 %v459
    %465 = vmatprep.subr.bf16.mxu0 0
    %466 = vmatpush1.bf16.msra.mxu0 %v460
    %467 = vmatprep.subr.bf16.mxu0 0
    %468 = vmatpush1.bf16.msra.mxu0 0
    %469 = vmatprep.subr.bf16.mxu0 0
    %470 = vmatpush1.bf16.msra.mxu0 0
    %471 = vmatprep.subr.bf16.mxu0 0
    %472 = vmatpush1.bf16.msra.mxu0 0
    %473 = vmatprep.subr.bf16.mxu0 0
    %474 = vmatpush1.bf16.msra.mxu0 0
    %475 = vmatprep.subr.bf16.mxu0 0
    %476 = vmatpush1.bf16.msra.mxu0 0
    %477 = vmatprep.subr.bf16.mxu0 0
    %478 = vmatpush1.bf16.msra.mxu0 0
    %479 = vmatprep.subr.bf16.mxu0 0
    %480 = vmatpush1.bf16.msra.mxu0 0
    %481 = vmatprep.subr.bf16.mxu0 0
    %482 = vmatpush1.bf16.msra.mxu0 0
    %483 = vmatprep.subr.bf16.mxu0 0
    %484 = vmatpush1.bf16.msra.mxu0 0
    %485 = vmatprep.subr.bf16.mxu0 0
    %486 = vmatpush1.bf16.msra.mxu0 0
    %487 = vmatprep.subr.bf16.mxu0 0
    %488 = vmatpush1.bf16.msra.mxu0 0
    %489 = vmatprep.subr.bf16.mxu0 0
    %490 = vmatpush1.bf16.msra.mxu0 0
    %491 = vmatprep.subr.bf16.mxu0 0
    %492 = vmatpush1.bf16.msra.mxu0 0
    %493 = vmatprep.subr.bf16.mxu0 0
    %494 = vmatpush1.bf16.msra.mxu0 0
    %495 = vmatprep.mubr.bf16.mxu0 0
    %496 = vmatmul.mubr.bf16.gmra.mrb[0].mxu0 %v112
    %v497 = vpop.f32.mrb[0].mxu0
    %v498 = vadd.f32 0.0, %v497
    %v499 = vpop.f32.mrb[0].mxu0
    %v500 = vpop.f32.mrb[0].mxu0
    %v501 = vadd.f32 0.0, %v500
    %v502 = vpop.f32.mrb[0].mxu0
    %503 = vdwg.mxu0
    %v504 = vld [vmem:[%s2] sm:$0x7]
    %v507 = vrot.slane %v274, 1
    %v508 = vrot.slane %v278, 1
    %v511 = vadd.f32 %v149, %v507
    %v512 = vadd.f32 %v153, %v508
    %v513 = vlaneseq
    %v514 = vshrl.u32 %v513, 7
    %v515 = vsub.s32 0, %v514
    %v516 = vrot.slane %v504, %v515
    %v517 = vadd.f32 %v511, %v516
    %v518 = vadd.f32 %v512, %v516
    %v519 = vmax.f32 %v517, 0.0
    %v520 = vmax.f32 %v518, 0.0
    %vm521 = vcmask 1046528
    %v522 = vsel %vm521, %v519, -inf
    %v523 = vrot.slane %v522, 4
    %v524 = vmax.f32 %v522, %v523
    %v525 = vrot.slane %v524, 2
    %v526 = vmax.f32 %v524, %v525
    %v527 = vrot.slane %v526, 1
    %v528 = vmax.f32 %v526, %v527
    %v529 = vsel %vm521, %v520, -inf
    %v530 = vrot.slane %v529, 4
    %v531 = vmax.f32 %v529, %v530
    %v532 = vrot.slane %v531, 2
    %v533 = vmax.f32 %v531, %v532
    %v534 = vrot.slane %v533, 1
    %v535 = vmax.f32 %v533, %v534
    %v536 = vpack.c.bf16 %v528, %v528
    %v537 = vpack.c.bf16 %v535, %v535
    %v538 = vld [vmem:[#allocation7] sm:$0xf]
    %v539 = vld [vmem:[#allocation7 + $0x4] sm:$0xf]
    %v540 = vld [vmem:[#allocation7 + $0x8] sm:$0xf]
    %v541 = vld [vmem:[#allocation7 + $0xc] sm:$0xf]
    %v542 = vld [vmem:[#allocation7 + $0x10] sm:$0xf]
    %v543 = vld [vmem:[#allocation7 + $0x14] sm:$0xf]
    %v544 = vld [vmem:[#allocation7 + $0x18] sm:$0xf]
    %v545 = vld [vmem:[#allocation7 + $0x1c] sm:$0xf]
    %v546 = vld [vmem:[#allocation7 + $0x20] sm:$0xf]
    %v547 = vld [vmem:[#allocation7 + $0x24] sm:$0xf]
    %v548 = vld [vmem:[#allocation7 + $0x28] sm:$0xf]
    %v549 = vld [vmem:[#allocation7 + $0x2c] sm:$0xf]
    %v550 = vld [vmem:[#allocation7 + $0x30] sm:$0xf]
    %v551 = vld [vmem:[#allocation7 + $0x34] sm:$0xf]
    %v552 = vld [vmem:[#allocation7 + $0x38] sm:$0xf]
    %v553 = vld [vmem:[#allocation7 + $0x3c] sm:$0xf]
    %v556 = vrot.slane %v276, 1
    %v557 = vrot.slane %v280, 1
    %v560 = vadd.f32 %v151, %v556
    %v561 = vadd.f32 %v155, %v557
    %v564 = vrot.slane %v400, 2
    %v565 = vrot.slane %v403, 2
    %v568 = vadd.f32 %v560, %v564
    %v569 = vadd.f32 %v561, %v565
    %v570 = vlaneseq
    %v571 = vshrl.u32 %v570, 7
    %v572 = vsub.s32 1, %v571
    %v573 = vrot.slane %v504, %v572
    %v574 = vadd.f32 %v568, %v573
    %v575 = vadd.f32 %v569, %v573
    %v576 = vmax.f32 %v574, 0.0
    %v577 = vmax.f32 %v575, 0.0
    %vm578 = vcmask 1045504
    %v579 = vsel %vm578, %v576, -inf
    %v580 = vrot.slane %v579, 4
    %v581 = vmax.f32 %v579, %v580
    %v582 = vrot.slane %v581, 2
    %v583 = vmax.f32 %v581, %v582
    %v584 = vrot.slane %v583, 1
    %v585 = vmax.f32 %v583, %v584
    %v586 = vsel %vm578, %v577, -inf
    %v587 = vrot.slane %v586, 4
    %v588 = vmax.f32 %v586, %v587
    %v589 = vrot.slane %v588, 2
    %v590 = vmax.f32 %v588, %v589
    %v591 = vrot.slane %v590, 1
    %v592 = vmax.f32 %v590, %v591
    %v593 = vpack.c.bf16 %v585, %v585
    %v594 = vpack.c.bf16 %v592, %v592
    %s595 = scalar_lea.vmem [#allocation7], 64
    %v596 = vld [vmem:[%s595] sm:$0xf]
    %v597 = vld [vmem:[%s595 + $0x4] sm:$0xf]
    %v598 = vld [vmem:[%s595 + $0x8] sm:$0xf]
    %v599 = vld [vmem:[%s595 + $0xc] sm:$0xf]
    %v600 = vld [vmem:[%s595 + $0x10] sm:$0xf]
    %v601 = vld [vmem:[%s595 + $0x14] sm:$0xf]
    %v602 = vld [vmem:[%s595 + $0x18] sm:$0xf]
    %v603 = vld [vmem:[%s595 + $0x1c] sm:$0xf]
    %v604 = vld [vmem:[%s595 + $0x20] sm:$0xf]
    %v605 = vld [vmem:[%s595 + $0x24] sm:$0xf]
    %v606 = vld [vmem:[%s595 + $0x28] sm:$0xf]
    %v607 = vld [vmem:[%s595 + $0x2c] sm:$0xf]
    %v608 = vld [vmem:[%s595 + $0x30] sm:$0xf]
    %v609 = vld [vmem:[%s595 + $0x34] sm:$0xf]
    %v610 = vld [vmem:[%s595 + $0x38] sm:$0xf]
    %v611 = vld [vmem:[%s595 + $0x3c] sm:$0xf]
    %v614 = vunpack.c.l.b16 %v593
    %v615 = vunpack.c.l.b16 %v594
    %vm616 = vcmask 1041409
    %v617 = vsel %vm616, %v615, %v614
    %v618 = vpack.c.b16 %v617, %v617
    %v636 = vunpack.c.l.b16 %v596
    %v637 = vunpack.c.l.b16 %v597
    %v638 = vunpack.c.l.b16 %v598
    %v639 = vunpack.c.l.b16 %v599
    %v640 = vunpack.c.l.b16 %v600
    %v641 = vunpack.c.l.b16 %v601
    %v642 = vunpack.c.l.b16 %v602
    %v643 = vunpack.c.l.b16 %v603
    %v644 = vunpack.c.l.b16 %v604
    %v645 = vunpack.c.l.b16 %v605
    %v646 = vunpack.c.l.b16 %v606
    %v647 = vunpack.c.l.b16 %v607
    %v648 = vunpack.c.l.b16 %v608
    %v649 = vunpack.c.l.b16 %v609
    %v650 = vunpack.c.l.b16 %v610
    %v651 = vunpack.c.l.b16 %v611
    %v652 = vpack.c.b16 %v637, %v636
    %v653 = vpack.c.b16 %v639, %v638
    %v654 = vpack.c.b16 %v641, %v640
    %v655 = vpack.c.b16 %v643, %v642
    %v656 = vpack.c.b16 %v645, %v644
    %v657 = vpack.c.b16 %v647, %v646
    %v658 = vpack.c.b16 %v649, %v648
    %v659 = vpack.c.b16 %v651, %v650
    %668 = vmatprep.subr.bf16.mxu0 0
    %669 = vmatpush1.bf16.msra.mxu0 %v652
    %670 = vmatprep.subr.bf16.mxu0 0
    %671 = vmatpush1.bf16.msra.mxu0 %v653
    %672 = vmatprep.subr.bf16.mxu0 0
    %673 = vmatpush1.bf16.msra.mxu0 %v654
    %674 = vmatprep.subr.bf16.mxu0 0
    %675 = vmatpush1.bf16.msra.mxu0 %v655
    %676 = vmatprep.subr.bf16.mxu0 0
    %677 = vmatpush1.bf16.msra.mxu0 %v656
    %678 = vmatprep.subr.bf16.mxu0 0
    %679 = vmatpush1.bf16.msra.mxu0 %v657
    %680 = vmatprep.subr.bf16.mxu0 0
    %681 = vmatpush1.bf16.msra.mxu0 %v658
    %682 = vmatprep.subr.bf16.mxu0 0
    %683 = vmatpush1.bf16.msra.mxu0 %v659
    %684 = vmatprep.subr.bf16.mxu0 0
    %685 = vmatpush1.bf16.msra.mxu0 0
    %686 = vmatprep.subr.bf16.mxu0 0
    %687 = vmatpush1.bf16.msra.mxu0 0
    %688 = vmatprep.subr.bf16.mxu0 0
    %689 = vmatpush1.bf16.msra.mxu0 0
    %690 = vmatprep.subr.bf16.mxu0 0
    %691 = vmatpush1.bf16.msra.mxu0 0
    %692 = vmatprep.subr.bf16.mxu0 0
    %693 = vmatpush1.bf16.msra.mxu0 0
    %694 = vmatprep.subr.bf16.mxu0 0
    %695 = vmatpush1.bf16.msra.mxu0 0
    %696 = vmatprep.subr.bf16.mxu0 0
    %697 = vmatpush1.bf16.msra.mxu0 0
    %698 = vmatprep.subr.bf16.mxu0 0
    %699 = vmatpush1.bf16.msra.mxu0 0
    %700 = vmatprep.mubr.bf16.mxu0 0
    %701 = vmatmul.mubr.bf16.gmra.mrb[0].mxu0 %v618
    %v702 = vpop.f32.mrb[0].mxu0
    %v703 = vadd.f32 0.0, %v702
    %v704 = vpop.f32.mrb[0].mxu0
    %v705 = vpop.f32.mrb[0].mxu0
    %v706 = vpop.f32.mrb[0].mxu0
    %707 = vdwg.mxu0
    %v710 = vunpack.c.l.b16 %v536
    %v711 = vunpack.c.l.b16 %v537
    %v712 = vsel %vm616, %v711, %v710
    %v713 = vpack.c.b16 %v712, %v712
    %v731 = vunpack.c.l.b16 %v538
    %v732 = vunpack.c.l.b16 %v539
    %v733 = vunpack.c.l.b16 %v540
    %v734 = vunpack.c.l.b16 %v541
    %v735 = vunpack.c.l.b16 %v542
    %v736 = vunpack.c.l.b16 %v543
    %v737 = vunpack.c.l.b16 %v544
    %v738 = vunpack.c.l.b16 %v545
    %v739 = vunpack.c.l.b16 %v546
    %v740 = vunpack.c.l.b16 %v547
    %v741 = vunpack.c.l.b16 %v548
    %v742 = vunpack.c.l.b16 %v549
    %v743 = vunpack.c.l.b16 %v550
    %v744 = vunpack.c.l.b16 %v551
    %v745 = vunpack.c.l.b16 %v552
    %v746 = vunpack.c.l.b16 %v553
    %v747 = vpack.c.b16 %v732, %v731
    %v748 = vpack.c.b16 %v734, %v733
    %v749 = vpack.c.b16 %v736, %v735
    %v750 = vpack.c.b16 %v738, %v737
    %v751 = vpack.c.b16 %v740, %v739
    %v752 = vpack.c.b16 %v742, %v741
    %v753 = vpack.c.b16 %v744, %v743
    %v754 = vpack.c.b16 %v746, %v745
    %763 = vmatprep.subr.bf16.mxu0 0
    %764 = vmatpush1.bf16.msra.mxu0 %v747
    %765 = vmatprep.subr.bf16.mxu0 0
    %766 = vmatpush1.bf16.msra.mxu0 %v748
    %767 = vmatprep.subr.bf16.mxu0 0
    %768 = vmatpush1.bf16.msra.mxu0 %v749
    %769 = vmatprep.subr.bf16.mxu0 0
    %770 = vmatpush1.bf16.msra.mxu0 %v750
    %771 = vmatprep.subr.bf16.mxu0 0
    %772 = vmatpush1.bf16.msra.mxu0 %v751
    %773 = vmatprep.subr.bf16.mxu0 0
    %774 = vmatpush1.bf16.msra.mxu0 %v752
    %775 = vmatprep.subr.bf16.mxu0 0
    %776 = vmatpush1.bf16.msra.mxu0 %v753
    %777 = vmatprep.subr.bf16.mxu0 0
    %778 = vmatpush1.bf16.msra.mxu0 %v754
    %779 = vmatprep.subr.bf16.mxu0 0
    %780 = vmatpush1.bf16.msra.mxu0 0
    %781 = vmatprep.subr.bf16.mxu0 0
    %782 = vmatpush1.bf16.msra.mxu0 0
    %783 = vmatprep.subr.bf16.mxu0 0
    %784 = vmatpush1.bf16.msra.mxu0 0
    %785 = vmatprep.subr.bf16.mxu0 0
    %786 = vmatpush1.bf16.msra.mxu0 0
    %787 = vmatprep.subr.bf16.mxu0 0
    %788 = vmatpush1.bf16.msra.mxu0 0
    %789 = vmatprep.subr.bf16.mxu0 0
    %790 = vmatpush1.bf16.msra.mxu0 0
    %791 = vmatprep.subr.bf16.mxu0 0
    %792 = vmatpush1.bf16.msra.mxu0 0
    %793 = vmatprep.subr.bf16.mxu0 0
    %794 = vmatpush1.bf16.msra.mxu0 0
    %795 = vmatprep.mubr.bf16.mxu0 0
    %796 = vmatmul.mubr.bf16.gmra.mrb[0].mxu0 %v713
    %v797 = vpop.f32.mrb[0].mxu0
    %v798 = vadd.f32 %v703, %v797
    %v799 = vpop.f32.mrb[0].mxu0
    %v800 = vpop.f32.mrb[0].mxu0
    %v801 = vpop.f32.mrb[0].mxu0
    %802 = vdwg.mxu0
    %v805 = vrot.slane %v317, 1
    %v806 = vrot.slane %v320, 1
    %v809 = vadd.f32 %v192, %v805
    %v810 = vadd.f32 %v195, %v806
    %v813 = vrot.slane %v440, 2
    %v814 = vrot.slane %v443, 2
    %v817 = vadd.f32 %v809, %v813
    %v818 = vadd.f32 %v810, %v814
    %v821 = vrot.slane %v498, 3
    %v822 = vrot.slane %v501, 3
    %v825 = vadd.f32 %v817, %v821
    %v826 = vadd.f32 %v818, %v822
    %v827 = vlaneseq
    %v828 = vshrl.u32 %v827, 7
    %v829 = vsub.s32 2, %v828
    %v830 = vrot.slane %v504, %v829
    %v831 = vadd.f32 %v825, %v830
    %v832 = vadd.f32 %v826, %v830
    %v833 = vmax.f32 %v831, 0.0
    %v834 = vmax.f32 %v832, 0.0
    %vm835 = vcmask 1044480
    %v836 = vsel %vm835, %v833, -inf
    %v837 = vrot.slane %v836, 4
    %v838 = vmax.f32 %v836, %v837
    %v839 = vrot.slane %v838, 2
    %v840 = vmax.f32 %v838, %v839
    %v841 = vrot.slane %v840, 1
    %v842 = vmax.f32 %v840, %v841
    %v843 = vsel %vm835, %v834, -inf
    %v844 = vrot.slane %v843, 4
    %v845 = vmax.f32 %v843, %v844
    %v846 = vrot.slane %v845, 2
    %v847 = vmax.f32 %v845, %v846
    %v848 = vrot.slane %v847, 1
    %v849 = vmax.f32 %v847, %v848
    %v850 = vpack.c.bf16 %v842, %v842
    %v851 = vpack.c.bf16 %v849, %v849
    %s852 = scalar_lea.vmem [#allocation7], 128
    %v853 = vld [vmem:[%s852] sm:$0xf]
    %v854 = vld [vmem:[%s852 + $0x4] sm:$0xf]
    %v855 = vld [vmem:[%s852 + $0x8] sm:$0xf]
    %v856 = vld [vmem:[%s852 + $0xc] sm:$0xf]
    %v857 = vld [vmem:[%s852 + $0x10] sm:$0xf]
    %v858 = vld [vmem:[%s852 + $0x14] sm:$0xf]
    %v859 = vld [vmem:[%s852 + $0x18] sm:$0xf]
    %v860 = vld [vmem:[%s852 + $0x1c] sm:$0xf]
    %v861 = vld [vmem:[%s852 + $0x20] sm:$0xf]
    %v862 = vld [vmem:[%s852 + $0x24] sm:$0xf]
    %v863 = vld [vmem:[%s852 + $0x28] sm:$0xf]
    %v864 = vld [vmem:[%s852 + $0x2c] sm:$0xf]
    %v865 = vld [vmem:[%s852 + $0x30] sm:$0xf]
    %v866 = vld [vmem:[%s852 + $0x34] sm:$0xf]
    %v867 = vld [vmem:[%s852 + $0x38] sm:$0xf]
    %v868 = vld [vmem:[%s852 + $0x3c] sm:$0xf]
    %v871 = vunpack.c.l.b16 %v850
    %v872 = vunpack.c.l.b16 %v851
    %v873 = vsel %vm616, %v872, %v871
    %v874 = vpack.c.b16 %v873, %v873
    %v892 = vunpack.c.l.b16 %v853
    %v893 = vunpack.c.l.b16 %v854
    %v894 = vunpack.c.l.b16 %v855
    %v895 = vunpack.c.l.b16 %v856
    %v896 = vunpack.c.l.b16 %v857
    %v897 = vunpack.c.l.b16 %v858
    %v898 = vunpack.c.l.b16 %v859
    %v899 = vunpack.c.l.b16 %v860
    %v900 = vunpack.c.l.b16 %v861
    %v901 = vunpack.c.l.b16 %v862
    %v902 = vunpack.c.l.b16 %v863
    %v903 = vunpack.c.l.b16 %v864
    %v904 = vunpack.c.l.b16 %v865
    %v905 = vunpack.c.l.b16 %v866
    %v906 = vunpack.c.l.b16 %v867
    %v907 = vunpack.c.l.b16 %v868
    %v908 = vpack.c.b16 %v893, %v892
    %v909 = vpack.c.b16 %v895, %v894
    %v910 = vpack.c.b16 %v897, %v896
    %v911 = vpack.c.b16 %v899, %v898
    %v912 = vpack.c.b16 %v901, %v900
    %v913 = vpack.c.b16 %v903, %v902
    %v914 = vpack.c.b16 %v905, %v904
    %v915 = vpack.c.b16 %v907, %v906
    %924 = vmatprep.subr.bf16.mxu0 0
    %925 = vmatpush1.bf16.msra.mxu0 %v908
    %926 = vmatprep.subr.bf16.mxu0 0
    %927 = vmatpush1.bf16.msra.mxu0 %v909
    %928 = vmatprep.subr.bf16.mxu0 0
    %929 = vmatpush1.bf16.msra.mxu0 %v910
    %930 = vmatprep.subr.bf16.mxu0 0
    %931 = vmatpush1.bf16.msra.mxu0 %v911
    %932 = vmatprep.subr.bf16.mxu0 0
    %933 = vmatpush1.bf16.msra.mxu0 %v912
    %934 = vmatprep.subr.bf16.mxu0 0
    %935 = vmatpush1.bf16.msra.mxu0 %v913
    %936 = vmatprep.subr.bf16.mxu0 0
    %937 = vmatpush1.bf16.msra.mxu0 %v914
    %938 = vmatprep.subr.bf16.mxu0 0
    %939 = vmatpush1.bf16.msra.mxu0 %v915
    %940 = vmatprep.subr.bf16.mxu0 0
    %941 = vmatpush1.bf16.msra.mxu0 0
    %942 = vmatprep.subr.bf16.mxu0 0
    %943 = vmatpush1.bf16.msra.mxu0 0
    %944 = vmatprep.subr.bf16.mxu0 0
    %945 = vmatpush1.bf16.msra.mxu0 0
    %946 = vmatprep.subr.bf16.mxu0 0
    %947 = vmatpush1.bf16.msra.mxu0 0
    %948 = vmatprep.subr.bf16.mxu0 0
    %949 = vmatpush1.bf16.msra.mxu0 0
    %950 = vmatprep.subr.bf16.mxu0 0
    %951 = vmatpush1.bf16.msra.mxu0 0
    %952 = vmatprep.subr.bf16.mxu0 0
    %953 = vmatpush1.bf16.msra.mxu0 0
    %954 = vmatprep.subr.bf16.mxu0 0
    %955 = vmatpush1.bf16.msra.mxu0 0
    %956 = vmatprep.mubr.bf16.mxu0 0
    %957 = vmatmul.mubr.bf16.gmra.mrb[0].mxu0 %v874
    %v958 = vpop.f32.mrb[0].mxu0
    %v959 = vadd.f32 0.0, %v958
    %v960 = vpop.f32.mrb[0].mxu0
    %v961 = vpop.f32.mrb[0].mxu0
    %v962 = vpop.f32.mrb[0].mxu0
    %963 = vdwg.mxu0
    %v964 = vadd.f32 %v798, %v959
    %v965 = vld [vmem:[%s4] sm:$0x1]
    %v967 = vlaneseq
    %v968 = vshrl.u32 %v967, 7
    %v969 = vsub.s32 0, %v968
    %v970 = vrot.slane %v965, %v969
    %v972 = vadd.f32 %v964, %v970
    %973 = vst [vmem:[#allocation8] sm:$0x3] %v972
    // Predicated region
    $region34: #{tpu_custom_call.1} parent=1 // pred_check
      _
    $region35: #{tpu_custom_call.1} parent=1 // pred_check_branch
      %975 = sbr.rel (0) target = $region37
    $region36: #{tpu_custom_call.1} parent=1 // pred_region
      %s977 = ssub.s32 32, 32
      %978 = vsyncadd [#allocation4], %s977
      %s980 = sshll.u32 [#allocation8], 4
      %s981 = int_to_ptr.vmem [resolvable:$true] %s980
      %983 = dma.vmem_to_hbm [thread:$0]  %s981, 32, %s5, [#allocation4]
    $region37: #{tpu_custom_call.1} parent=1 // pred_fallthru
      _
    // Predicated region
    $region38: #{tpu_custom_call.1} parent=1 // pred_check
      _
    $region39: #{tpu_custom_call.1} parent=1 // pred_check_branch
      %985 = sbr.rel (0) target = $region41
    $region40: #{tpu_custom_call.1} parent=1 // pred_region
      %986 = dma.done [#allocation4], 32
    $region41: #{tpu_custom_call.1} parent=1 // pred_fallthru
      _
    %987 = vsyncpa [#allocation3], 1
    %988 = vsyncpa [#allocation6], 1
    %989 = vsyncpa [#allocation4], 1

</llo_original>
